<compile_context>
chip_gen: v6e
topology: v6e:2x2x1
jax: 0.10.0
libtpu: 0.0.40
codegen_flags: <defaults>
</compile_context>

<pallas_src>
import jax
import jax.numpy as jnp
from jax.experimental import pallas as pl
from jax.experimental.pallas import tpu as pltpu


def _round_up(x: int, m: int) -> int:
    return ((x + m - 1) // m) * m


def _actor_kernel(x_ref, w1_ref, b1_ref, w2_ref, b2_ref, w3_ref, b3_ref, out_ref):
    # fc1 + ReLU
    h1 = jnp.dot(x_ref[...], w1_ref[...], preferred_element_type=jnp.float32)
    h1 = jnp.maximum(h1 + b1_ref[...], 0.0)
    # fc2 + ReLU
    h2 = jnp.dot(h1, w2_ref[...], preferred_element_type=jnp.float32)
    h2 = jnp.maximum(h2 + b2_ref[...], 0.0)
    # mu + tanh (output is lane-padded to a multiple of 128; extra lanes are
    # tanh(0 + 0) = 0 and get sliced off in the wrapper)
    mu = jnp.dot(h2, w3_ref[...], preferred_element_type=jnp.float32)
    out_ref[...] = jnp.tanh(mu + b3_ref[...]).astype(out_ref.dtype)


def actor_forward(state, params):
    """state: [B, input_dim] float32. params: dict of (w1,b1,w2,b2,w3,b3)."""
    w1, b1, w2, b2, w3, b3 = (
        params["w1"], params["b1"], params["w2"],
        params["b2"], params["w3"], params["b3"],
    )
    B, input_dim = state.shape
    fc1_dims = w1.shape[1]
    fc2_dims = w2.shape[1]
    no_actions = w3.shape[1]

    # ---- batch tiling: 8-row minimum, up to 512 rows per grid step ----------
    TB = min(512, _round_up(B, 8))
    B_pad = _round_up(B, TB)
    if B_pad != B:
        state = jnp.pad(state, ((0, B_pad - B), (0, 0)))
    grid = (B_pad // TB,)

    # ---- lane-dense output: pad mu layer to a multiple of 128 lanes ---------
    n_pad = _round_up(no_actions, 128)
    if n_pad != no_actions:
        w3p = jnp.pad(w3, ((0, 0), (0, n_pad - no_actions)))
        b3p = jnp.pad(b3, ((0, 0), (0, n_pad - no_actions)))
    else:
        w3p, b3p = w3, b3

    def resident_spec(shape):
        # Full-array block, same block every grid step -> VMEM-resident weights.
        return pl.BlockSpec(shape, lambda i: tuple(0 for _ in shape))

    cost = pl.CostEstimate(
        flops=2 * B_pad * (input_dim * fc1_dims + fc1_dims * fc2_dims + fc2_dims * n_pad),
        transcendentals=B_pad * n_pad,  # tanh
        bytes_accessed=4 * (
            B_pad * input_dim + B_pad * n_pad
            + input_dim * fc1_dims + fc1_dims
            + fc1_dims * fc2_dims + fc2_dims
            + fc2_dims * n_pad + n_pad
        ),
    )

    out_padded = pl.pallas_call(
        _actor_kernel,
        out_shape=jax.ShapeDtypeStruct((B_pad, n_pad), jnp.float32),
        grid=grid,
        in_specs=[
            pl.BlockSpec((TB, input_dim), lambda i: (i, 0)),
            resident_spec(w1.shape), resident_spec(b1.shape),
            resident_spec(w2.shape), resident_spec(b2.shape),
            resident_spec(w3p.shape), resident_spec(b3p.shape),
        ],
        out_specs=pl.BlockSpec((TB, n_pad), lambda i: (i, 0)),
        compiler_params=pltpu.CompilerParams(
            dimension_semantics=("parallel",),
            # Explicit budget so the 2-deep pipeline survives on v7x (64 MiB
            # physical / 32 MiB scoped default). Usage here is far below this.
            vmem_limit_bytes=32 * 1024 * 1024,
        ),
        cost_estimate=cost,
    )(state, w1, b1, w2, b2, w3p, b3p)

    return out_padded[:B, :no_actions]


def init_actor_params(key, input_dim, fc1_dims, fc2_dims, no_actions):
    """Deterministic init mimicking nn.Linear's uniform(-1/sqrt(fan_in), 1/sqrt(fan_in)).
    Weights stored as [in, out] (transpose of PyTorch's [out, in])."""
    ks = jax.random.split(key, 6)

    def linear(kw, kb, fan_in, fan_out):
        bound = 1.0 / jnp.sqrt(jnp.float32(fan_in))
        w = jax.random.uniform(kw, (fan_in, fan_out), jnp.float32, -bound, bound)
        b = jax.random.uniform(kb, (1, fan_out), jnp.float32, -bound, bound)
        return w, b

    w1, b1 = linear(ks[0], ks[1], input_dim, fc1_dims)
    w2, b2 = linear(ks[2], ks[3], fc1_dims, fc2_dims)
    w3, b3 = linear(ks[4], ks[5], fc2_dims, no_actions)
    return {"w1": w1, "b1": b1, "w2": w2, "b2": b2, "w3": w3, "b3": b3}


def actor_reference(state, params):
    """Pure-JAX reference of the PyTorch forward pass."""
    h1 = jnp.maximum(state @ params["w1"] + params["b1"], 0.0)
    h2 = jnp.maximum(h1 @ params["w2"] + params["b2"], 0.0)
    return jnp.tanh(h2 @ params["w3"] + params["b3"])


if __name__ == "__main__":
    key = jax.random.PRNGKey(0)
    k_params, k_state = jax.random.split(key)

    # Small shapes consistent with the module: input_dims=(8,), fc1=32, fc2=32,
    # no_actions=4, batch=2.  (Note: at B=2 this is launch-overhead dominated;
    # the kernel is sized so large batches tile at 512 rows/step.)
    input_dim, fc1_dims, fc2_dims, no_actions = 8, 32, 32, 4
    batch = 2

    params = init_actor_params(k_params, input_dim, fc1_dims, fc2_dims, no_actions)
    state = jax.random.normal(k_state, (batch, input_dim), jnp.float32)

    out = actor_forward(state, params)
    out = jax.block_until_ready(out)

    ref = actor_reference(state, params)
    assert out.shape == (batch, no_actions)
    assert jnp.allclose(out, ref, atol=1e-5, rtol=1e-5), "mismatch vs reference"

    print("KERNEL_OK")
</pallas_src>

<mosaic_0001>
module attributes {stable_mosaic.version = 11 : i64} {
  func.func @_actor_kernel(%arg0: i32, %arg1: memref<8x8xf32, #tpu.memory_space<vmem>>, %arg2: memref<8x32xf32, #tpu.memory_space<vmem>>, %arg3: memref<1x32xf32, #tpu.memory_space<vmem>>, %arg4: memref<32x32xf32, #tpu.memory_space<vmem>>, %arg5: memref<1x32xf32, #tpu.memory_space<vmem>>, %arg6: memref<32x128xf32, #tpu.memory_space<vmem>>, %arg7: memref<1x128xf32, #tpu.memory_space<vmem>>, %arg8: memref<8x128xf32, #tpu.memory_space<vmem>>) attributes {dimension_semantics = [#tpu.dimension_semantics<parallel>], iteration_bounds = array<i64: 1>, scalar_prefetch = 0 : i64, scratch_operands = 0 : i64, tpu.core_type = #tpu.core_type<tc>, window_params = [{transform_indices = @transform_0, window_bounds = array<i64: 8, 8>}, {pipeline_mode = #tpu.pipeline_mode<synchronous>, transform_indices = @transform_1, window_bounds = array<i64: 8, 32>}, {pipeline_mode = #tpu.pipeline_mode<synchronous>, transform_indices = @transform_2, window_bounds = array<i64: 1, 32>}, {pipeline_mode = #tpu.pipeline_mode<synchronous>, transform_indices = @transform_3, window_bounds = array<i64: 32, 32>}, {pipeline_mode = #tpu.pipeline_mode<synchronous>, transform_indices = @transform_4, window_bounds = array<i64: 1, 32>}, {pipeline_mode = #tpu.pipeline_mode<synchronous>, transform_indices = @transform_5, window_bounds = array<i64: 32, 128>}, {pipeline_mode = #tpu.pipeline_mode<synchronous>, transform_indices = @transform_6, window_bounds = array<i64: 1, 128>}, {transform_indices = @transform_7, window_bounds = array<i64: 8, 128>}]} {
    %c0 = arith.constant 0 : index
    %c0_0 = arith.constant 0 : index
    %0 = vector.load %arg1[%c0, %c0_0] : memref<8x8xf32, #tpu.memory_space<vmem>>, vector<8x8xf32>
    %c0_1 = arith.constant 0 : index
    %c0_2 = arith.constant 0 : index
    %1 = vector.load %arg2[%c0_1, %c0_2] : memref<8x32xf32, #tpu.memory_space<vmem>>, vector<8x32xf32>
    %cst = arith.constant dense<0.000000e+00> : vector<8x32xf32>
    %2 = tpu.matmul %0, %1, %cst {dimension_numbers = #tpu.dot_dimension_numbers<[1], [0], [0], [1], [0, 0, 1, 1], [], []>} : vector<8x8xf32>, vector<8x32xf32>, vector<8x32xf32> -> vector<8x32xf32>
    %c0_3 = arith.constant 0 : index
    %c0_4 = arith.constant 0 : index
    %3 = vector.load %arg3[%c0_3, %c0_4] : memref<1x32xf32, #tpu.memory_space<vmem>>, vector<1x32xf32>
    %4 = vector.broadcast %3 : vector<1x32xf32> to vector<8x32xf32>
    %5 = arith.addf %2, %4 : vector<8x32xf32>
    %cst_5 = arith.constant 0.000000e+00 : f32
    %6 = vector.broadcast %cst_5 : f32 to vector<8x32xf32>
    %7 = arith.maximumf %5, %6 : vector<8x32xf32>
    %c0_6 = arith.constant 0 : index
    %c0_7 = arith.constant 0 : index
    %8 = vector.load %arg4[%c0_6, %c0_7] : memref<32x32xf32, #tpu.memory_space<vmem>>, vector<32x32xf32>
    %cst_8 = arith.constant dense<0.000000e+00> : vector<8x32xf32>
    %9 = tpu.matmul %7, %8, %cst_8 {dimension_numbers = #tpu.dot_dimension_numbers<[1], [0], [0], [1], [0, 0, 1, 1], [], []>} : vector<8x32xf32>, vector<32x32xf32>, vector<8x32xf32> -> vector<8x32xf32>
    %c0_9 = arith.constant 0 : index
    %c0_10 = arith.constant 0 : index
    %10 = vector.load %arg5[%c0_9, %c0_10] : memref<1x32xf32, #tpu.memory_space<vmem>>, vector<1x32xf32>
    %11 = vector.broadcast %10 : vector<1x32xf32> to vector<8x32xf32>
    %12 = arith.addf %9, %11 : vector<8x32xf32>
    %cst_11 = arith.constant 0.000000e+00 : f32
    %13 = vector.broadcast %cst_11 : f32 to vector<8x32xf32>
    %14 = arith.maximumf %12, %13 : vector<8x32xf32>
    %c0_12 = arith.constant 0 : index
    %c0_13 = arith.constant 0 : index
    %15 = vector.load %arg6[%c0_12, %c0_13] : memref<32x128xf32, #tpu.memory_space<vmem>>, vector<32x128xf32>
    %cst_14 = arith.constant dense<0.000000e+00> : vector<8x128xf32>
    %16 = tpu.matmul %14, %15, %cst_14 {dimension_numbers = #tpu.dot_dimension_numbers<[1], [0], [0], [1], [0, 0, 1, 1], [], []>} : vector<8x32xf32>, vector<32x128xf32>, vector<8x128xf32> -> vector<8x128xf32>
    %c0_15 = arith.constant 0 : index
    %c0_16 = arith.constant 0 : index
    %17 = vector.load %arg7[%c0_15, %c0_16] : memref<1x128xf32, #tpu.memory_space<vmem>>, vector<1x128xf32>
    %18 = vector.broadcast %17 : vector<1x128xf32> to vector<8x128xf32>
    %19 = arith.addf %16, %18 : vector<8x128xf32>
    %20 = math.tanh %19 : vector<8x128xf32>
    %c0_17 = arith.constant 0 : index
    %c0_18 = arith.constant 0 : index
    %21 = vector.load %arg8[%c0_17, %c0_18] : memref<8x128xf32, #tpu.memory_space<vmem>>, vector<8x128xf32>
    tpu.vector_store %arg8[%c0_17, %c0_18], %20 {strides = array<i32>} : memref<8x128xf32, #tpu.memory_space<vmem>>, vector<8x128xf32>,
    return
  }
  func.func @transform_0(%arg0: i32) -> (i32, i32) {
    %c0_i32 = arith.constant 0 : i32
    %c0_i32_0 = arith.constant 0 : i32
    return %arg0, %c0_i32 : i32, i32
  }
  func.func @transform_1(%arg0: i32) -> (i32, i32) {
    %c0_i32 = arith.constant 0 : i32
    %c0_i32_0 = arith.constant 0 : i32
    %c0_i32_1 = arith.constant 0 : i32
    return %c0_i32, %c0_i32_0 : i32, i32
  }
  func.func @transform_2(%arg0: i32) -> (i32, i32) {
    %c0_i32 = arith.constant 0 : i32
    %c0_i32_0 = arith.constant 0 : i32
    %c0_i32_1 = arith.constant 0 : i32
    return %c0_i32, %c0_i32_0 : i32, i32
  }
  func.func @transform_3(%arg0: i32) -> (i32, i32) {
    %c0_i32 = arith.constant 0 : i32
    %c0_i32_0 = arith.constant 0 : i32
    %c0_i32_1 = arith.constant 0 : i32
    return %c0_i32, %c0_i32_0 : i32, i32
  }
  func.func @transform_4(%arg0: i32) -> (i32, i32) {
    %c0_i32 = arith.constant 0 : i32
    %c0_i32_0 = arith.constant 0 : i32
    %c0_i32_1 = arith.constant 0 : i32
    return %c0_i32, %c0_i32_0 : i32, i32
  }
  func.func @transform_5(%arg0: i32) -> (i32, i32) {
    %c0_i32 = arith.constant 0 : i32
    %c0_i32_0 = arith.constant 0 : i32
    %c0_i32_1 = arith.constant 0 : i32
    return %c0_i32, %c0_i32_0 : i32, i32
  }
  func.func @transform_6(%arg0: i32) -> (i32, i32) {
    %c0_i32 = arith.constant 0 : i32
    %c0_i32_0 = arith.constant 0 : i32
    %c0_i32_1 = arith.constant 0 : i32
    return %c0_i32, %c0_i32_0 : i32, i32
  }
  func.func @transform_7(%arg0: i32) -> (i32, i32) {
    %c0_i32 = arith.constant 0 : i32
    %c0_i32_0 = arith.constant 0 : i32
    return %arg0, %c0_i32 : i32, i32
  }
}

</mosaic_0001>

<llo_original>
// kernel: tpu_custom_call.1
$region0: #{tpu_custom_call.1}
  #allocation0 [shape = 'u32[]', space=smem, size = 0x4, offset = 0x4, fixed_abs, tag = 'smem constant byte address 0x4 - core index']
  #allocation1 [shape = 'u32[144,128]{1,0:T(1,128)}', space=vmem, size = 0x12000, scoped, tag = 'internal scratch']
  %s0 = inlined_call_operand.hbm [shape: f32[8,8], index: 0, kind: input, shape index: {}]
  %s1 = inlined_call_operand.hbm [shape: f32[8,32], index: 1, kind: input, shape index: {}]
  %s2 = inlined_call_operand.vmem [shape: f32[1,32], index: 2, kind: input, shape index: {}]
  %s3 = inlined_call_operand.hbm [shape: f32[32,32], index: 3, kind: input, shape index: {}]
  %s4 = inlined_call_operand.vmem [shape: f32[1,32], index: 4, kind: input, shape index: {}]
  %s5 = inlined_call_operand.hbm [shape: f32[32,128], index: 5, kind: input, shape index: {}]
  %s6 = inlined_call_operand.vmem [shape: f32[1,128], index: 6, kind: input, shape index: {}]
  %s7 = inlined_call_operand.hbm [shape: f32[8,128], index: 7, kind: output, shape index: {}]
  %s8 = sld [smem:[#allocation0]]
  $region54: #{tpu_custom_call.1} parent=0
    _
  %s10 = ssub.s32 1, %s8
  %s11 = scalar_select 0, %s10, %s8
  $region1: #{tpu_custom_call.1} parent=0
    #allocation2 [shape = 'u8[4096]{0}', space=vmem, size = 0x1000, scoped, tag = 'input window, operand 0, single buffered']
    #allocation3 [shape = 's32[1]{0}', space=sflag, size = 0x4, scoped, tag = 'scoped memory for tpu_custom_call.1']
    #allocation4 [shape = 's32[1]{0}', space=sflag, size = 0x4, scoped, tag = 'scoped memory for tpu_custom_call.1']
    #allocation5 [shape = 'u8[4096]{0}', space=vmem, size = 0x1000, scoped, tag = 'input window, operand 1, single buffered']
    #allocation6 [shape = 's32[1]{0}', space=sflag, size = 0x4, scoped, tag = 'scoped memory for tpu_custom_call.1']
    #allocation7 [shape = 'u8[16384]{0}', space=vmem, size = 0x4000, scoped, tag = 'input window, operand 3, single buffered']
    #allocation8 [shape = 'u8[16384]{0}', space=vmem, size = 0x4000, scoped, tag = 'input window, operand 5, single buffered']
    #allocation9 [shape = 's32[1]{0}', space=sflag, size = 0x4, scoped, tag = 'scoped memory for tpu_custom_call.1']
    #allocation10 [shape = 'u8[4096]{0}', space=vmem, size = 0x1000, scoped, tag = 'output window, operand 0, single buffered']
    %12 = vsyncpa [#allocation3], 0
    %13 = vsyncpa [#allocation6], 0
    %14 = vsyncpa [#allocation9], 0
    %15 = vsyncpa [#allocation4], 0
    // Predicated region
    $region2: #{tpu_custom_call.1} parent=1 // pred_check
      _
    $region3: #{tpu_custom_call.1} parent=1 // pred_check_branch
      %17 = sbr.rel (0) target = $region5
    $region4: #{tpu_custom_call.1} parent=1 // pred_region
      %s19 = ssub.s32 128, 128
      %20 = vsyncadd [#allocation3], %s19
      %s22 = sshll.u32 [#allocation2], 4
      %s23 = int_to_ptr.vmem [resolvable:$true] %s22
      %25 = dma.hbm_to_vmem [thread:$0]  %s0, 128, %s23, [#allocation3]
    $region5: #{tpu_custom_call.1} parent=1 // pred_fallthru
      _
    // Predicated region
    $region6: #{tpu_custom_call.1} parent=1 // pred_check
      _
    $region7: #{tpu_custom_call.1} parent=1 // pred_check_branch
      %27 = sbr.rel (0) target = $region9
    $region8: #{tpu_custom_call.1} parent=1 // pred_region
      %s29 = ssub.s32 128, 128
      %30 = vsyncadd [#allocation6], %s29
      %s32 = sshll.u32 [#allocation5], 4
      %s33 = int_to_ptr.vmem [resolvable:$true] %s32
      %35 = dma.hbm_to_vmem [thread:$0]  %s1, 128, %s33, [#allocation6]
    $region9: #{tpu_custom_call.1} parent=1 // pred_fallthru
      _
    // Predicated region
    $region10: #{tpu_custom_call.1} parent=1 // pred_check
      _
    $region11: #{tpu_custom_call.1} parent=1 // pred_check_branch
      %37 = sbr.rel (0) target = $region13
    $region12: #{tpu_custom_call.1} parent=1 // pred_region
      _
    $region13: #{tpu_custom_call.1} parent=1 // pred_fallthru
      _
    // Predicated region
    $region14: #{tpu_custom_call.1} parent=1 // pred_check
      _
    $region15: #{tpu_custom_call.1} parent=1 // pred_check_branch
      %39 = sbr.rel (0) target = $region17
    $region16: #{tpu_custom_call.1} parent=1 // pred_region
      %s41 = ssub.s32 512, 512
      %42 = vsyncadd [#allocation6], %s41
      %s43 = sshll.u32 [#allocation7], 4
      %s44 = int_to_ptr.vmem [resolvable:$true] %s43
      %49 = dma.hbm_to_vmem [thread:$0]  %s3, 512, %s44, [#allocation6], 128, 128, 8
    $region17: #{tpu_custom_call.1} parent=1 // pred_fallthru
      _
    // Predicated region
    $region18: #{tpu_custom_call.1} parent=1 // pred_check
      _
    $region19: #{tpu_custom_call.1} parent=1 // pred_check_branch
      %51 = sbr.rel (0) target = $region21
    $region20: #{tpu_custom_call.1} parent=1 // pred_region
      _
    $region21: #{tpu_custom_call.1} parent=1 // pred_fallthru
      _
    // Predicated region
    $region22: #{tpu_custom_call.1} parent=1 // pred_check
      _
    $region23: #{tpu_custom_call.1} parent=1 // pred_check_branch
      %53 = sbr.rel (0) target = $region25
    $region24: #{tpu_custom_call.1} parent=1 // pred_region
      %s55 = ssub.s32 512, 512
      %56 = vsyncadd [#allocation9], %s55
      %s57 = sshll.u32 [#allocation8], 4
      %s58 = int_to_ptr.vmem [resolvable:$true] %s57
      %63 = dma.hbm_to_vmem [thread:$0]  %s5, 512, %s58, [#allocation9], 128, 128, 8
    $region25: #{tpu_custom_call.1} parent=1 // pred_fallthru
      _
    // Predicated region
    $region26: #{tpu_custom_call.1} parent=1 // pred_check
      _
    $region27: #{tpu_custom_call.1} parent=1 // pred_check_branch
      %65 = sbr.rel (0) target = $region29
    $region28: #{tpu_custom_call.1} parent=1 // pred_region
      _
    $region29: #{tpu_custom_call.1} parent=1 // pred_fallthru
      _
    // Predicated region
    $region30: #{tpu_custom_call.1} parent=1 // pred_check
      _
    $region31: #{tpu_custom_call.1} parent=1 // pred_check_branch
      %67 = sbr.rel (0) target = $region33
    $region32: #{tpu_custom_call.1} parent=1 // pred_region
      %68 = dma.done [#allocation3], 128
    $region33: #{tpu_custom_call.1} parent=1 // pred_fallthru
      _
    // Predicated region
    $region34: #{tpu_custom_call.1} parent=1 // pred_check
      _
    $region35: #{tpu_custom_call.1} parent=1 // pred_check_branch
      %70 = sbr.rel (0) target = $region37
    $region36: #{tpu_custom_call.1} parent=1 // pred_region
      %71 = dma.done [#allocation6], 128
    $region37: #{tpu_custom_call.1} parent=1 // pred_fallthru
      _
    // Predicated region
    $region38: #{tpu_custom_call.1} parent=1 // pred_check
      _
    $region39: #{tpu_custom_call.1} parent=1 // pred_check_branch
      %73 = sbr.rel (0) target = $region41
    $region40: #{tpu_custom_call.1} parent=1 // pred_region
      %74 = dma.done [#allocation6], 512
    $region41: #{tpu_custom_call.1} parent=1 // pred_fallthru
      _
    // Predicated region
    $region42: #{tpu_custom_call.1} parent=1 // pred_check
      _
    $region43: #{tpu_custom_call.1} parent=1 // pred_check_branch
      %76 = sbr.rel (0) target = $region45
    $region44: #{tpu_custom_call.1} parent=1 // pred_region
      %77 = dma.done [#allocation9], 512
    $region45: #{tpu_custom_call.1} parent=1 // pred_fallthru
      _
    %v78 = vld [vmem:[#allocation2] sm:$0xff]
    %v79 = vld [vmem:[#allocation5] sm:$0xff]
    %v80 = vld [vmem:[%s2] sm:$0x1]
    %v82 = vlaneseq
    %v83 = vshrl.u32 %v82, 7
    %v84 = vsub.s32 0, %v83
    %v85 = vrot.slane %v80, %v84
    %vm87 = vcmask 64512
    %v89 = vsel %vm87, %v78, 0
    %91 = vmatprep.subr.mxu0 0.0
    %92 = vmatpush1.msra.mxu0 0.0
    %93 = vmatprep.subr.mxu0 0.0
    %94 = vmatpush1.msra.mxu0 0.0
    %95 = vmatprep.subr.mxu0 0.0
    %96 = vmatpush1.msra.mxu0 0.0
    %97 = vmatprep.subr.mxu0 0.0
    %98 = vmatpush1.msra.mxu0 0.0
    %99 = vmatprep.subr.mxu0 0.0
    %100 = vmatpush1.msra.mxu0 0.0
    %101 = vmatprep.subr.mxu0 0.0
    %102 = vmatpush1.msra.mxu0 0.0
    %103 = vmatprep.subr.mxu0 0.0
    %104 = vmatpush1.msra.mxu0 0.0
    %105 = vmatprep.subr.mxu0 0.0
    %106 = vmatpush1.msra.mxu0 0.0
    %107 = vmatprep.subr.mxu0 0.0
    %108 = vmatpush1.msra.mxu0 0.0
    %109 = vmatprep.subr.mxu0 0.0
    %110 = vmatpush1.msra.mxu0 0.0
    %111 = vmatprep.subr.mxu0 0.0
    %112 = vmatpush1.msra.mxu0 0.0
    %113 = vmatprep.subr.mxu0 0.0
    %114 = vmatpush1.msra.mxu0 0.0
    %115 = vmatprep.subr.mxu0 0.0
    %116 = vmatpush1.msra.mxu0 0.0
    %117 = vmatprep.subr.mxu0 0.0
    %118 = vmatpush1.msra.mxu0 0.0
    %119 = vmatprep.subr.mxu0 0.0
    %120 = vmatpush1.msra.mxu0 0.0
    %121 = vmatprep.subr.mxu0 0.0
    %122 = vmatpush1.msra.mxu0 %v79
    %123 = vmatprep.subr.mxu0 0.0
    %124 = vmatpush2.msra.mxu0 0.0
    %125 = vmatprep.subr.mxu0 0.0
    %126 = vmatpush2.msra.mxu0 0.0
    %127 = vmatprep.subr.mxu0 0.0
    %128 = vmatpush2.msra.mxu0 0.0
    %129 = vmatprep.subr.mxu0 0.0
    %130 = vmatpush2.msra.mxu0 0.0
    %131 = vmatprep.subr.mxu0 0.0
    %132 = vmatpush2.msra.mxu0 0.0
    %133 = vmatprep.subr.mxu0 0.0
    %134 = vmatpush2.msra.mxu0 0.0
    %135 = vmatprep.subr.mxu0 0.0
    %136 = vmatpush2.msra.mxu0 0.0
    %137 = vmatprep.subr.mxu0 0.0
    %138 = vmatpush2.msra.mxu0 0.0
    %139 = vmatprep.subr.mxu0 0.0
    %140 = vmatpush2.msra.mxu0 0.0
    %141 = vmatprep.subr.mxu0 0.0
    %142 = vmatpush2.msra.mxu0 0.0
    %143 = vmatprep.subr.mxu0 0.0
    %144 = vmatpush2.msra.mxu0 0.0
    %145 = vmatprep.subr.mxu0 0.0
    %146 = vmatpush2.msra.mxu0 0.0
    %147 = vmatprep.subr.mxu0 0.0
    %148 = vmatpush2.msra.mxu0 0.0
    %149 = vmatprep.subr.mxu0 0.0
    %150 = vmatpush2.msra.mxu0 0.0
    %151 = vmatprep.subr.mxu0 0.0
    %152 = vmatpush2.msra.mxu0 0.0
    %153 = vmatprep.subr.mxu0 0.0
    %154 = vmatpush2.msra.mxu0 0.0
    %155 = vmatprep.mubr.f32.mxu0 0.0
    %156 = vmatmul.mubr.f32.gmra.mxu0 %v89
    %v157 = vpop.f32.mrf.mxu0
    %v158 = vadd.f32 %v85, %v157
    %v159 = vpop.f32.mrf.mxu0
    %160 = vdwg.mxu0
    %v161 = vmax.f32 %v158, 0.0
    %v162 = vld [vmem:[#allocation7] sm:$0xff]
    %v163 = vld [vmem:[#allocation7 + $0x8] sm:$0xff]
    %v164 = vld [vmem:[#allocation7 + $0x10] sm:$0xff]
    %v165 = vld [vmem:[#allocation7 + $0x18] sm:$0xff]
    %v166 = vld [vmem:[%s4] sm:$0x1]
    %v168 = vlaneseq
    %v169 = vshrl.u32 %v168, 7
    %v170 = vsub.s32 0, %v169
    %v171 = vrot.slane %v166, %v170
    %vm173 = vcmask 261120
    %v175 = vsel %vm173, %v161, 0
    %177 = vmatprep.subr.mxu0 0.0
    %178 = vmatpush1.msra.mxu0 0.0
    %179 = vmatprep.subr.mxu0 0.0
    %180 = vmatpush1.msra.mxu0 0.0
    %181 = vmatprep.subr.mxu0 0.0
    %182 = vmatpush1.msra.mxu0 0.0
    %183 = vmatprep.subr.mxu0 0.0
    %184 = vmatpush1.msra.mxu0 0.0
    %185 = vmatprep.subr.mxu0 0.0
    %186 = vmatpush1.msra.mxu0 0.0
    %187 = vmatprep.subr.mxu0 0.0
    %188 = vmatpush1.msra.mxu0 0.0
    %189 = vmatprep.subr.mxu0 0.0
    %190 = vmatpush1.msra.mxu0 0.0
    %191 = vmatprep.subr.mxu0 0.0
    %192 = vmatpush1.msra.mxu0 0.0
    %193 = vmatprep.subr.mxu0 0.0
    %194 = vmatpush1.msra.mxu0 0.0
    %195 = vmatprep.subr.mxu0 0.0
    %196 = vmatpush1.msra.mxu0 0.0
    %197 = vmatprep.subr.mxu0 0.0
    %198 = vmatpush1.msra.mxu0 0.0
    %199 = vmatprep.subr.mxu0 0.0
    %200 = vmatpush1.msra.mxu0 0.0
    %201 = vmatprep.subr.mxu0 0.0
    %202 = vmatpush1.msra.mxu0 %v165
    %203 = vmatprep.subr.mxu0 0.0
    %204 = vmatpush1.msra.mxu0 %v164
    %205 = vmatprep.subr.mxu0 0.0
    %206 = vmatpush1.msra.mxu0 %v163
    %207 = vmatprep.subr.mxu0 0.0
    %208 = vmatpush1.msra.mxu0 %v162
    %209 = vmatprep.subr.mxu0 0.0
    %210 = vmatpush2.msra.mxu0 0.0
    %211 = vmatprep.subr.mxu0 0.0
    %212 = vmatpush2.msra.mxu0 0.0
    %213 = vmatprep.subr.mxu0 0.0
    %214 = vmatpush2.msra.mxu0 0.0
    %215 = vmatprep.subr.mxu0 0.0
    %216 = vmatpush2.msra.mxu0 0.0
    %217 = vmatprep.subr.mxu0 0.0
    %218 = vmatpush2.msra.mxu0 0.0
    %219 = vmatprep.subr.mxu0 0.0
    %220 = vmatpush2.msra.mxu0 0.0
    %221 = vmatprep.subr.mxu0 0.0
    %222 = vmatpush2.msra.mxu0 0.0
    %223 = vmatprep.subr.mxu0 0.0
    %224 = vmatpush2.msra.mxu0 0.0
    %225 = vmatprep.subr.mxu0 0.0
    %226 = vmatpush2.msra.mxu0 0.0
    %227 = vmatprep.subr.mxu0 0.0
    %228 = vmatpush2.msra.mxu0 0.0
    %229 = vmatprep.subr.mxu0 0.0
    %230 = vmatpush2.msra.mxu0 0.0
    %231 = vmatprep.subr.mxu0 0.0
    %232 = vmatpush2.msra.mxu0 0.0
    %233 = vmatprep.subr.mxu0 0.0
    %234 = vmatpush2.msra.mxu0 0.0
    %235 = vmatprep.subr.mxu0 0.0
    %236 = vmatpush2.msra.mxu0 0.0
    %237 = vmatprep.subr.mxu0 0.0
    %238 = vmatpush2.msra.mxu0 0.0
    %239 = vmatprep.subr.mxu0 0.0
    %240 = vmatpush2.msra.mxu0 0.0
    %241 = vmatprep.mubr.f32.mxu0 0.0
    %242 = vmatmul.mubr.f32.gmra.mxu0 %v175
    %v243 = vpop.f32.mrf.mxu0
    %v244 = vadd.f32 %v171, %v243
    %v245 = vpop.f32.mrf.mxu0
    %246 = vdwg.mxu0
    %v247 = vmax.f32 %v244, 0.0
    %v248 = vld [vmem:[#allocation8] sm:$0xff]
    %v249 = vld [vmem:[#allocation8 + $0x8] sm:$0xff]
    %v250 = vld [vmem:[#allocation8 + $0x10] sm:$0xff]
    %v251 = vld [vmem:[#allocation8 + $0x18] sm:$0xff]
    %v252 = vld [vmem:[%s6] sm:$0x1]
    %v254 = vlaneseq
    %v255 = vshrl.u32 %v254, 7
    %v256 = vsub.s32 0, %v255
    %v257 = vrot.slane %v252, %v256
    %v260 = vsel %vm173, %v247, 0
    %262 = vmatprep.subr.mxu0 0.0
    %263 = vmatpush1.msra.mxu0 0.0
    %264 = vmatprep.subr.mxu0 0.0
    %265 = vmatpush1.msra.mxu0 0.0
    %266 = vmatprep.subr.mxu0 0.0
    %267 = vmatpush1.msra.mxu0 0.0
    %268 = vmatprep.subr.mxu0 0.0
    %269 = vmatpush1.msra.mxu0 0.0
    %270 = vmatprep.subr.mxu0 0.0
    %271 = vmatpush1.msra.mxu0 0.0
    %272 = vmatprep.subr.mxu0 0.0
    %273 = vmatpush1.msra.mxu0 0.0
    %274 = vmatprep.subr.mxu0 0.0
    %275 = vmatpush1.msra.mxu0 0.0
    %276 = vmatprep.subr.mxu0 0.0
    %277 = vmatpush1.msra.mxu0 0.0
    %278 = vmatprep.subr.mxu0 0.0
    %279 = vmatpush1.msra.mxu0 0.0
    %280 = vmatprep.subr.mxu0 0.0
    %281 = vmatpush1.msra.mxu0 0.0
    %282 = vmatprep.subr.mxu0 0.0
    %283 = vmatpush1.msra.mxu0 0.0
    %284 = vmatprep.subr.mxu0 0.0
    %285 = vmatpush1.msra.mxu0 0.0
    %286 = vmatprep.subr.mxu0 0.0
    %287 = vmatpush1.msra.mxu0 %v251
    %288 = vmatprep.subr.mxu0 0.0
    %289 = vmatpush1.msra.mxu0 %v250
    %290 = vmatprep.subr.mxu0 0.0
    %291 = vmatpush1.msra.mxu0 %v249
    %292 = vmatprep.subr.mxu0 0.0
    %293 = vmatpush1.msra.mxu0 %v248
    %294 = vmatprep.subr.mxu0 0.0
    %295 = vmatpush2.msra.mxu0 0.0
    %296 = vmatprep.subr.mxu0 0.0
    %297 = vmatpush2.msra.mxu0 0.0
    %298 = vmatprep.subr.mxu0 0.0
    %299 = vmatpush2.msra.mxu0 0.0
    %300 = vmatprep.subr.mxu0 0.0
    %301 = vmatpush2.msra.mxu0 0.0
    %302 = vmatprep.subr.mxu0 0.0
    %303 = vmatpush2.msra.mxu0 0.0
    %304 = vmatprep.subr.mxu0 0.0
    %305 = vmatpush2.msra.mxu0 0.0
    %306 = vmatprep.subr.mxu0 0.0
    %307 = vmatpush2.msra.mxu0 0.0
    %308 = vmatprep.subr.mxu0 0.0
    %309 = vmatpush2.msra.mxu0 0.0
    %310 = vmatprep.subr.mxu0 0.0
    %311 = vmatpush2.msra.mxu0 0.0
    %312 = vmatprep.subr.mxu0 0.0
    %313 = vmatpush2.msra.mxu0 0.0
    %314 = vmatprep.subr.mxu0 0.0
    %315 = vmatpush2.msra.mxu0 0.0
    %316 = vmatprep.subr.mxu0 0.0
    %317 = vmatpush2.msra.mxu0 0.0
    %318 = vmatprep.subr.mxu0 0.0
    %319 = vmatpush2.msra.mxu0 0.0
    %320 = vmatprep.subr.mxu0 0.0
    %321 = vmatpush2.msra.mxu0 0.0
    %322 = vmatprep.subr.mxu0 0.0
    %323 = vmatpush2.msra.mxu0 0.0
    %324 = vmatprep.subr.mxu0 0.0
    %325 = vmatpush2.msra.mxu0 0.0
    %326 = vmatprep.mubr.f32.mxu0 0.0
    %327 = vmatmul.mubr.f32.gmra.mxu0 %v260
    %v328 = vpop.f32.mrf.mxu0
    %v329 = vadd.f32 %v257, %v328
    %v330 = vpop.f32.mrf.mxu0
    %331 = vdwg.mxu0
    %v332 = vtanh.pop %v329
    %333 = vst [vmem:[#allocation10] sm:$0xff] %v332
    // Predicated region
    $region46: #{tpu_custom_call.1} parent=1 // pred_check
      _
    $region47: #{tpu_custom_call.1} parent=1 // pred_check_branch
      %335 = sbr.rel (0) target = $region49
    $region48: #{tpu_custom_call.1} parent=1 // pred_region
      %s337 = ssub.s32 128, 128
      %338 = vsyncadd [#allocation4], %s337
      %s340 = sshll.u32 [#allocation10], 4
      %s341 = int_to_ptr.vmem [resolvable:$true] %s340
      %343 = dma.vmem_to_hbm [thread:$0]  %s341, 128, %s7, [#allocation4]
    $region49: #{tpu_custom_call.1} parent=1 // pred_fallthru
      _
    // Predicated region
    $region50: #{tpu_custom_call.1} parent=1 // pred_check
      _
    $region51: #{tpu_custom_call.1} parent=1 // pred_check_branch
      %345 = sbr.rel (0) target = $region53
    $region52: #{tpu_custom_call.1} parent=1 // pred_region
      %346 = dma.done [#allocation4], 128
    $region53: #{tpu_custom_call.1} parent=1 // pred_fallthru
      _
    %347 = vsyncpa [#allocation3], 1
    %348 = vsyncpa [#allocation6], 1
    %349 = vsyncpa [#allocation9], 1
    %350 = vsyncpa [#allocation4], 1

</llo_original>
